<compile_context>
chip_gen: v5e
topology: v5e:2x2
jax: 0.10.0
libtpu: 0.0.40
codegen_flags: <defaults>
</compile_context>

<pallas_src>
import functools

import jax
import jax.numpy as jnp
import numpy as np
from jax.experimental import pallas as pl
from jax.experimental.pallas import tpu as pltpu


def _round_up(x, m):
    return ((x + m - 1) // m) * m


# --------------------------------------------------------------------------- #
# Kernel 1: per-column min / max / sum, accumulated across the T grid axis.
# Output [1, F] blocks are resident in VMEM across the whole (reduction) grid.
# --------------------------------------------------------------------------- #
def _stats_kernel(y_ref, min_ref, max_ref, sum_ref, *,
                  total_rows, tile_t, needs_mask):
    i = pl.program_id(0)
    y = y_ref[...].astype(jnp.float32)                            # [tile_t, F]

    if needs_mask:
        # Only the ragged-last-tile case pays for the mask (static branch).
        row = jax.lax.broadcasted_iota(jnp.int32, y.shape, 0) + i * tile_t
        valid = row < total_rows
        y_min_in = jnp.where(valid, y, jnp.inf)
        y_max_in = jnp.where(valid, y, -jnp.inf)
        y_sum_in = jnp.where(valid, y, 0.0)
    else:
        y_min_in = y_max_in = y_sum_in = y

    blk_min = jnp.min(y_min_in, axis=0, keepdims=True)
    blk_max = jnp.max(y_max_in, axis=0, keepdims=True)
    blk_sum = jnp.sum(y_sum_in, axis=0, keepdims=True)

    @pl.when(i == 0)
    def _init():
        min_ref[...] = blk_min
        max_ref[...] = blk_max
        sum_ref[...] = blk_sum

    @pl.when(i > 0)
    def _accumulate():
        min_ref[...] = jnp.minimum(min_ref[...], blk_min)
        max_ref[...] = jnp.maximum(max_ref[...], blk_max)
        sum_ref[...] = sum_ref[...] + blk_sum


def _column_stats(y, tile_t):
    T, F = y.shape
    grid = (pl.cdiv(T, tile_t),)
    kern = functools.partial(_stats_kernel, total_rows=T, tile_t=tile_t,
                             needs_mask=(T % tile_t != 0))
    row_spec = pl.BlockSpec((1, F), lambda i: (0, 0))
    return pl.pallas_call(
        kern,
        out_shape=(jax.ShapeDtypeStruct((1, F), jnp.float32),
                   jax.ShapeDtypeStruct((1, F), jnp.float32),
                   jax.ShapeDtypeStruct((1, F), jnp.float32)),
        grid=grid,
        in_specs=[pl.BlockSpec((tile_t, F), lambda i: (i, 0))],
        out_specs=(row_spec, row_spec, row_spec),
        compiler_params=pltpu.CompilerParams(
            dimension_semantics=("arbitrary",)),   # reduction axis
    )(y)


# --------------------------------------------------------------------------- #
# Kernel 2: fused  o = (y - mean) * scale + bias   OR   o = y  (coin skipped).
# params (SMEM, f32[4]): [u, v, apply_flag, 1/T]
# --------------------------------------------------------------------------- #
def _apply_kernel(params_ref, min_ref, max_ref, sum_ref, y_ref, o_ref):
    apply_aug = params_ref[2] > 0.5

    @pl.when(apply_aug)
    def _augment():
        u = params_ref[0]
        v = params_ref[1]
        inv_t = params_ref[3]
        cmin = min_ref[...]                                       # [1, F]
        cmax = max_ref[...]
        mean = sum_ref[...] * inv_t
        bias = ((cmax - cmin) * u + cmin) * 0.5
        scale = 0.5 + v
        shift = bias - mean * scale
        y = y_ref[...].astype(jnp.float32)                        # [tile_t, F]
        o_ref[...] = (y * scale + shift).astype(o_ref.dtype)

    @pl.when(jnp.logical_not(apply_aug))
    def _passthrough():
        o_ref[...] = y_ref[...]


def _apply_affine(y, params, col_min, col_max, col_sum, tile_t):
    T, F = y.shape
    grid = (pl.cdiv(T, tile_t),)
    row_spec = pl.BlockSpec((1, F), lambda i: (0, 0))
    return pl.pallas_call(
        _apply_kernel,
        out_shape=jax.ShapeDtypeStruct((T, F), y.dtype),
        grid=grid,
        in_specs=[pl.BlockSpec(memory_space=pltpu.MemorySpace.SMEM),  # params
                  row_spec, row_spec, row_spec,                       # stats
                  pl.BlockSpec((tile_t, F), lambda i: (i, 0))],       # y tile
        out_specs=pl.BlockSpec((tile_t, F), lambda i: (i, 0)),
        compiler_params=pltpu.CompilerParams(
            dimension_semantics=("parallel",)),   # independent tiles -> 2 TCs on v7x
    )(params, col_min, col_max, col_sum, y)


# --------------------------------------------------------------------------- #
# Wrapper replicating BiasAndScale.forward on a dict with key 'y'.
# --------------------------------------------------------------------------- #
def bias_and_scale(data, key, prob=0.5, tile_t=512):
    """data['y']: [T, F] float array. Returns a new dict (other keys passed through)."""
    y = data['y']
    T, F = y.shape
    tile_t = int(max(8, min(_round_up(tile_t, 8), _round_up(T, 8))))

    # TODO(synk): torch.rand(1) host-side RNG has no in-kernel equivalent; the
    # coin flip / u / v scalars are drawn with jax.random at the wrapper level.
    k_coin, k_bias, k_scale = jax.random.split(key, 3)
    coin = jax.random.uniform(k_coin, ())
    u = jax.random.uniform(k_bias, ())
    v = jax.random.uniform(k_scale, ())
    apply_flag = (coin < prob).astype(jnp.float32)

    col_min, col_max, col_sum = _column_stats(y, tile_t)          # each [1, F] f32
    params = jnp.stack([u, v, apply_flag,
                        jnp.float32(1.0 / T)]).astype(jnp.float32)

    y_out = _apply_affine(y, params, col_min, col_max, col_sum, tile_t)

    out = dict(data)
    out['y'] = y_out
    return out


# --------------------------------------------------------------------------- #
# Pure-numpy reference mirroring the PyTorch forward.
# --------------------------------------------------------------------------- #
def _reference(y, coin, u, v, prob):
    y = np.asarray(y, dtype=np.float32)
    if coin < prob:
        r1 = y.min(axis=0)
        r2 = y.max(axis=0)
        yc = y - y.mean(axis=0)
        bias = ((r2 - r1) * np.float32(u) + r1) / 2.0
        scale = (1.5 - 0.5) * np.float32(v) + 0.5
        y = yc * scale + bias
    return y


if __name__ == "__main__":
    # Small "dataset": 256 time steps x 128 features (lane-dense last dim).
    T, F = 256, 128

    key = jax.random.PRNGKey(0)
    k_data, k_aux, k_aug = jax.random.split(key, 3)
    y = jax.random.normal(k_data, (T, F), dtype=jnp.float32)
    x = jax.random.normal(k_aux, (T, 4), dtype=jnp.float32)       # passthrough key
    data = {'x': x, 'y': y}

    # --- augmentation branch (prob=1.0 forces it; tile=128 -> 2-step grid) ---
    out = bias_and_scale(data, k_aug, prob=1.0, tile_t=128)
    y_out = jax.block_until_ready(out['y'])

    # Recreate the exact same random scalars for the reference.
    k_coin, k_bias, k_scale = jax.random.split(k_aug, 3)
    coin = float(jax.random.uniform(k_coin, ()))
    u = float(jax.random.uniform(k_bias, ()))
    v = float(jax.random.uniform(k_scale, ()))

    ref_y = _reference(np.asarray(y), coin, u, v, 1.0)
    np.testing.assert_allclose(np.asarray(y_out), ref_y, rtol=1e-5, atol=1e-4)
    np.testing.assert_allclose(np.asarray(out['x']), np.asarray(x))   # untouched key

    # --- skip branch (prob=0.0): in-kernel passthrough must be bit-exact ---
    out_skip = bias_and_scale(data, k_aug, prob=0.0, tile_t=128)
    y_skip = jax.block_until_ready(out_skip['y'])
    np.testing.assert_array_equal(np.asarray(y_skip), np.asarray(y))

    print("KERNEL_OK")
</pallas_src>

<mosaic_0001>
module attributes {stable_mosaic.version = 11 : i64} {
  func.func @_stats_kernel(%arg0: i32, %arg1: memref<128x128xf32, #tpu.memory_space<vmem>>, %arg2: memref<1x128xf32, #tpu.memory_space<vmem>>, %arg3: memref<1x128xf32, #tpu.memory_space<vmem>>, %arg4: memref<1x128xf32, #tpu.memory_space<vmem>>) attributes {dimension_semantics = [#tpu.dimension_semantics<arbitrary>], iteration_bounds = array<i64: 2>, scalar_prefetch = 0 : i64, scratch_operands = 0 : i64, tpu.core_type = #tpu.core_type<tc>, window_params = [{transform_indices = @transform_0, window_bounds = array<i64: 128, 128>}, {pipeline_mode = #tpu.pipeline_mode<synchronous>, transform_indices = @transform_1, window_bounds = array<i64: 1, 128>}, {pipeline_mode = #tpu.pipeline_mode<synchronous>, transform_indices = @transform_2, window_bounds = array<i64: 1, 128>}, {pipeline_mode = #tpu.pipeline_mode<synchronous>, transform_indices = @transform_3, window_bounds = array<i64: 1, 128>}]} {
    %c0 = arith.constant 0 : index
    %c0_0 = arith.constant 0 : index
    %0 = vector.load %arg1[%c0, %c0_0] : memref<128x128xf32, #tpu.memory_space<vmem>>, vector<128x128xf32>
    %cst = arith.constant dense<0x7F800000> : vector<128xf32>
    %1 = vector.multi_reduction <minimumf>, %0, %cst [0] : vector<128x128xf32> to vector<128xf32>
    %2 = vector.shape_cast %1 : vector<128xf32> to vector<1x128xf32>
    %cst_1 = arith.constant dense<0xFF800000> : vector<128xf32>
    %3 = vector.multi_reduction <maximumf>, %0, %cst_1 [0] : vector<128x128xf32> to vector<128xf32>
    %4 = vector.shape_cast %3 : vector<128xf32> to vector<1x128xf32>
    %cst_2 = arith.constant dense<0.000000e+00> : vector<128xf32>
    %5 = vector.multi_reduction <add>, %0, %cst_2 [0] : vector<128x128xf32> to vector<128xf32>
    %6 = vector.shape_cast %5 : vector<128xf32> to vector<1x128xf32>
    %c0_i32 = arith.constant 0 : i32
    %7 = arith.cmpi eq, %arg0, %c0_i32 : i32
    %8 = arith.extui %7 : i1 to i32
    %c0_i32_3 = arith.constant 0 : i32
    %9 = arith.cmpi ne, %8, %c0_i32_3 : i32
    scf.if %9 {
      %c0_6 = arith.constant 0 : index
      %c0_7 = arith.constant 0 : index
      %13 = vector.load %arg2[%c0_6, %c0_7] : memref<1x128xf32, #tpu.memory_space<vmem>>, vector<1x128xf32>
      tpu.vector_store %arg2[%c0_6, %c0_7], %2 {strides = array<i32>} : memref<1x128xf32, #tpu.memory_space<vmem>>, vector<1x128xf32>,
      %c0_8 = arith.constant 0 : index
      %c0_9 = arith.constant 0 : index
      %14 = vector.load %arg3[%c0_8, %c0_9] : memref<1x128xf32, #tpu.memory_space<vmem>>, vector<1x128xf32>
      tpu.vector_store %arg3[%c0_8, %c0_9], %4 {strides = array<i32>} : memref<1x128xf32, #tpu.memory_space<vmem>>, vector<1x128xf32>,
      %c0_10 = arith.constant 0 : index
      %c0_11 = arith.constant 0 : index
      %15 = vector.load %arg4[%c0_10, %c0_11] : memref<1x128xf32, #tpu.memory_space<vmem>>, vector<1x128xf32>
      tpu.vector_store %arg4[%c0_10, %c0_11], %6 {strides = array<i32>} : memref<1x128xf32, #tpu.memory_space<vmem>>, vector<1x128xf32>,
    } else {
    }
    %c0_i32_4 = arith.constant 0 : i32
    %10 = arith.cmpi sgt, %arg0, %c0_i32_4 : i32
    %11 = arith.extui %10 : i1 to i32
    %c0_i32_5 = arith.constant 0 : i32
    %12 = arith.cmpi ne, %11, %c0_i32_5 : i32
    scf.if %12 {
      %c0_6 = arith.constant 0 : index
      %c0_7 = arith.constant 0 : index
      %13 = vector.load %arg2[%c0_6, %c0_7] : memref<1x128xf32, #tpu.memory_space<vmem>>, vector<1x128xf32>
      %14 = arith.minimumf %13, %2 : vector<1x128xf32>
      %c0_8 = arith.constant 0 : index
      %c0_9 = arith.constant 0 : index
      %15 = vector.load %arg2[%c0_8, %c0_9] : memref<1x128xf32, #tpu.memory_space<vmem>>, vector<1x128xf32>
      tpu.vector_store %arg2[%c0_8, %c0_9], %14 {strides = array<i32>} : memref<1x128xf32, #tpu.memory_space<vmem>>, vector<1x128xf32>,
      %c0_10 = arith.constant 0 : index
      %c0_11 = arith.constant 0 : index
      %16 = vector.load %arg3[%c0_10, %c0_11] : memref<1x128xf32, #tpu.memory_space<vmem>>, vector<1x128xf32>
      %17 = arith.maximumf %16, %4 : vector<1x128xf32>
      %c0_12 = arith.constant 0 : index
      %c0_13 = arith.constant 0 : index
      %18 = vector.load %arg3[%c0_12, %c0_13] : memref<1x128xf32, #tpu.memory_space<vmem>>, vector<1x128xf32>
      tpu.vector_store %arg3[%c0_12, %c0_13], %17 {strides = array<i32>} : memref<1x128xf32, #tpu.memory_space<vmem>>, vector<1x128xf32>,
      %c0_14 = arith.constant 0 : index
      %c0_15 = arith.constant 0 : index
      %19 = vector.load %arg4[%c0_14, %c0_15] : memref<1x128xf32, #tpu.memory_space<vmem>>, vector<1x128xf32>
      %20 = arith.addf %19, %6 : vector<1x128xf32>
      %c0_16 = arith.constant 0 : index
      %c0_17 = arith.constant 0 : index
      %21 = vector.load %arg4[%c0_16, %c0_17] : memref<1x128xf32, #tpu.memory_space<vmem>>, vector<1x128xf32>
      tpu.vector_store %arg4[%c0_16, %c0_17], %20 {strides = array<i32>} : memref<1x128xf32, #tpu.memory_space<vmem>>, vector<1x128xf32>,
    } else {
    }
    return
  }
  func.func @transform_0(%arg0: i32) -> (i32, i32) {
    %c0_i32 = arith.constant 0 : i32
    %c0_i32_0 = arith.constant 0 : i32
    return %arg0, %c0_i32 : i32, i32
  }
  func.func @transform_1(%arg0: i32) -> (i32, i32) {
    %c0_i32 = arith.constant 0 : i32
    %c0_i32_0 = arith.constant 0 : i32
    %c0_i32_1 = arith.constant 0 : i32
    return %c0_i32, %c0_i32_0 : i32, i32
  }
  func.func @transform_2(%arg0: i32) -> (i32, i32) {
    %c0_i32 = arith.constant 0 : i32
    %c0_i32_0 = arith.constant 0 : i32
    %c0_i32_1 = arith.constant 0 : i32
    return %c0_i32, %c0_i32_0 : i32, i32
  }
  func.func @transform_3(%arg0: i32) -> (i32, i32) {
    %c0_i32 = arith.constant 0 : i32
    %c0_i32_0 = arith.constant 0 : i32
    %c0_i32_1 = arith.constant 0 : i32
    return %c0_i32, %c0_i32_0 : i32, i32
  }
}

</mosaic_0001>

<llo_original>
// kernel: tpu_custom_call.1
$region0: #{tpu_custom_call.1}
  #allocation0 [shape = 'u32[]', space=smem, size = 0x4, offset = 0x4, fixed_abs, tag = 'smem constant byte address 0x4 - core index']
  #allocation1 [shape = 'u32[72,128]{1,0:T(1,128)}', space=vmem, size = 0x9000, scoped, tag = 'internal scratch']
  %s0 = inlined_call_operand.hbm [shape: f32[256,128], index: 0, kind: input, shape index: {}]
  %s1 = inlined_call_operand.hbm [shape: f32[1,128], index: 1, kind: output, shape index: {0}]
  %s2 = inlined_call_operand.hbm [shape: f32[1,128], index: 2, kind: output, shape index: {1}]
  %s3 = inlined_call_operand.hbm [shape: f32[1,128], index: 3, kind: output, shape index: {2}]
  %4 = xla_tuple %s1, %s2, %s3
  %s5 = sld [smem:[#allocation0]]
  $region65: #{tpu_custom_call.1} parent=0
    _
  %s7 = ssub.s32 1, %s5
  %s8 = scalar_select 0, %s7, %s5
  $region1: #{tpu_custom_call.1} parent=0
    #allocation2 [shape = 'u8[131072]{0}', space=vmem, size = 0x20000, scoped, tag = 'input window, operand 0']
    #allocation3 [shape = 's32[2]{0}', space=sflag, size = 0x8, scoped, tag = 'scoped memory for tpu_custom_call.1']
    #allocation4 [shape = 's32[2]{0}', space=sflag, size = 0x8, scoped, tag = 'scoped memory for tpu_custom_call.1']
    #allocation5 [shape = 'u8[512]{0}', space=vmem, size = 0x400, scoped, tag = 'output window, operand 0, single buffered']
    #allocation6 [shape = 'u8[512]{0}', space=vmem, size = 0x400, scoped, tag = 'output window, operand 1, single buffered']
    #allocation7 [shape = 's32[1]{0}', space=sflag, size = 0x4, scoped, tag = 'scoped memory for tpu_custom_call.1']
    #allocation8 [shape = 'u8[512]{0}', space=vmem, size = 0x400, scoped, tag = 'output window, operand 2, single buffered']
    %9 = vsyncpa [#allocation3], 0
    %s10 = scalar_lea.sflag [#allocation3], 1
    %11 = vsyncpa %s10, 0
    %12 = vsyncpa [#allocation4], 0
    %13 = vsyncpa [#allocation7], 0
    loop: start=0, step=1, limit=4
    $region2: #{tpu_custom_call.1} parent=1 // loop_pre_header
      _
    $region3: #{tpu_custom_call.1} parent=1 // loop_header
      %s15 = sphi 0, %s19
      %p16 = scmp.ge.s32.totalorder %s15, 4
      %s25 = sphi 0, %s27
      %s28 = sphi 0, %s25
      %s29 = sphi 0, %s28
      %s45 = sphi 0, %s29
      %s49 = sphi 0, %s49
      %s51 = sphi 0, %s49
      %s52 = sphi 0, %s51
      %s66 = sphi 0, %s52
      %s70 = sphi 0, %s70
      %s72 = sphi 0, %s70
      %s73 = sphi 0, %s72
      %s87 = sphi 0, %s73
      %s91 = sphi 0, %s91
      %s93 = sphi 0, %s91
      %s94 = sphi 0, %s93
      %s108 = sphi 0, %s94
    $region4: #{tpu_custom_call.1} parent=1 // loop_header_branch
      %18 = sbr.rel (%p16) target = $region8
    $region5: #{tpu_custom_call.1} parent=1 // loop_body
      %s20 = ssub.s32 %s15, 1
      %s21 = ssub.s32 %s15, 2
      %s22 = sadd.s32 %s15, 1
      %s23 = ssub.s32 %s15, %s22
      %p24 = scmp.eq.s32.totalorder %s23, 0
      %s26 = sadd.s32 %s25, 1
      %s27 = scalar_select %p24, %s25, %s26
      %p30 = pneg %p24
      %p31 = scmp.eq.s32.totalorder %s15, 1
      %p32 = por %p30, %p31
      %p33 = scmp.ne.s32.totalorder %s25, %s28
      %p34 = scmp.eq.s32.totalorder %s15, 0
      %p35 = por %p33, %p34
      %p36 = scmp.ne.s32.totalorder %s25, %s28
      %p37 = scmp.eq.s32.totalorder %s20, 1
      %p38 = por %p36, %p37
      %p39 = scmp.ne.s32.totalorder %s28, %s29
      %p40 = scmp.eq.s32.totalorder %s20, 0
      %p41 = por %p39, %p40
      %p42 = scmp.ne.s32.totalorder %s28, %s29
      %p43 = scmp.eq.s32.totalorder %s21, 1
      %p44 = por %p42, %p43
      %p46 = scmp.ne.s32.totalorder %s29, %s45
      %p47 = scmp.eq.s32.totalorder %s21, 0
      %p48 = por %p46, %p47
      %s50 = sadd.s32 %s49, 1
      %p53 = scmp.eq.s32.totalorder %s15, 1
      %p54 = scmp.ne.s32.totalorder %s49, %s51
      %p55 = scmp.eq.s32.totalorder %s15, 0
      %p56 = por %p54, %p55
      %p57 = scmp.ne.s32.totalorder %s49, %s51
      %p58 = scmp.eq.s32.totalorder %s20, 1
      %p59 = por %p57, %p58
      %p60 = scmp.ne.s32.totalorder %s51, %s52
      %p61 = scmp.eq.s32.totalorder %s20, 0
      %p62 = por %p60, %p61
      %p63 = scmp.ne.s32.totalorder %s51, %s52
      %p64 = scmp.eq.s32.totalorder %s21, 1
      %p65 = por %p63, %p64
      %p67 = scmp.ne.s32.totalorder %s52, %s66
      %p68 = scmp.eq.s32.totalorder %s21, 0
      %p69 = por %p67, %p68
      %s71 = sadd.s32 %s70, 1
      %p74 = scmp.eq.s32.totalorder %s15, 1
      %p75 = scmp.ne.s32.totalorder %s70, %s72
      %p76 = scmp.eq.s32.totalorder %s15, 0
      %p77 = por %p75, %p76
      %p78 = scmp.ne.s32.totalorder %s70, %s72
      %p79 = scmp.eq.s32.totalorder %s20, 1
      %p80 = por %p78, %p79
      %p81 = scmp.ne.s32.totalorder %s72, %s73
      %p82 = scmp.eq.s32.totalorder %s20, 0
      %p83 = por %p81, %p82
      %p84 = scmp.ne.s32.totalorder %s72, %s73
      %p85 = scmp.eq.s32.totalorder %s21, 1
      %p86 = por %p84, %p85
      %p88 = scmp.ne.s32.totalorder %s73, %s87
      %p89 = scmp.eq.s32.totalorder %s21, 0
      %p90 = por %p88, %p89
      %s92 = sadd.s32 %s91, 1
      %p95 = scmp.eq.s32.totalorder %s15, 1
      %p96 = scmp.ne.s32.totalorder %s91, %s93
      %p97 = scmp.eq.s32.totalorder %s15, 0
      %p98 = por %p96, %p97
      %p99 = scmp.ne.s32.totalorder %s91, %s93
      %p100 = scmp.eq.s32.totalorder %s20, 1
      %p101 = por %p99, %p100
      %p102 = scmp.ne.s32.totalorder %s93, %s94
      %p103 = scmp.eq.s32.totalorder %s20, 0
      %p104 = por %p102, %p103
      %p105 = scmp.ne.s32.totalorder %s93, %s94
      %p106 = scmp.eq.s32.totalorder %s21, 1
      %p107 = por %p105, %p106
      %p109 = scmp.ne.s32.totalorder %s94, %s108
      %p110 = scmp.eq.s32.totalorder %s21, 0
      %p111 = por %p109, %p110
      %p112 = scmp.le.s32.totalorder 1, %s15
      %p113 = scmp.lt.s32.totalorder %s15, 3
      %p114 = pnand %p112, %p113
      %p115 = pneg %p114
      // Predicated region
      $region9: #{tpu_custom_call.1} parent=5 // pred_check
        _
      $region10: #{tpu_custom_call.1} parent=5 // pred_check_branch
        %117 = sbr.rel (%p114) target = $region12
      $region11: #{tpu_custom_call.1} parent=5 // pred_region
        %s118 = ssub.s32 %s15, 1
      $region12: #{tpu_custom_call.1} parent=5 // pred_fallthru
        _
      %p119 = scmp.lt.s32.totalorder %s15, 2
      // Predicated region
      $region13: #{tpu_custom_call.1} parent=5 // pred_check
        %p120 = pneg %p119
      $region14: #{tpu_custom_call.1} parent=5 // pred_check_branch
        %122 = sbr.rel (%p120) target = $region16
      $region15: #{tpu_custom_call.1} parent=5 // pred_region
        // Predicated region
        $region17: #{tpu_custom_call.1} parent=15 // pred_check
          %p123 = pneg %p35
        $region18: #{tpu_custom_call.1} parent=15 // pred_check_branch
          %125 = sbr.rel (%p123) target = $region20
        $region19: #{tpu_custom_call.1} parent=15 // pred_region
          %s126 = sand.u32 %s25, 1
          %s127 = scalar_lea.sflag [#allocation3], %s126
          %s128 = sand.u32 %s25, 1
          %s129 = smul.addr %s128, 128
          %s130 = scalar_lea.vmem [#allocation2], %s129
          %s131 = smul.u32 16, %s15
          %133 = vsyncadd %s127, 0
          %s134 = smul.addr %s131, 8
          %s135 = scalar_lea.hbm %s0, %s134
          %s136 = sshll.u32 %s135, 4
          %s137 = int_to_ptr.hbm [resolvable:$true] %s136
          %s138 = sshll.u32 %s130, 4
          %s139 = int_to_ptr.vmem [resolvable:$true] %s138
          %144 = dma.hbm_to_vmem [thread:$0]  %s137, 2048, %s139, %s127, 128, 128, 8
        $region20: #{tpu_custom_call.1} parent=15 // pred_fallthru
          _
      $region16: #{tpu_custom_call.1} parent=5 // pred_fallthru
        _
      %p145 = scmp.le.s32.totalorder 1, %s15
      %p146 = scmp.lt.s32.totalorder %s15, 3
      %p147 = pnand %p145, %p146
      %p148 = pneg %p147
      // Predicated region
      $region21: #{tpu_custom_call.1} parent=5 // pred_check
        _
      $region22: #{tpu_custom_call.1} parent=5 // pred_check_branch
        %150 = sbr.rel (%p147) target = $region24
      $region23: #{tpu_custom_call.1} parent=5 // pred_region
        %s151 = ssub.s32 %s15, 1
        %s152 = sand.u32 %s28, 1
        %s153 = scalar_lea.sflag [#allocation3], %s152
        %s154 = sand.u32 %s28, 1
        %s155 = smul.addr %s154, 128
        %s156 = scalar_lea.vmem [#allocation2], %s155
        // Predicated region
        $region25: #{tpu_custom_call.1} parent=23 // pred_check
          %p157 = pneg %p41
        $region26: #{tpu_custom_call.1} parent=23 // pred_check_branch
          %159 = sbr.rel (%p157) target = $region28
        $region27: #{tpu_custom_call.1} parent=23 // pred_region
          %161 = dma.done %s153, 2048
        $region28: #{tpu_custom_call.1} parent=23 // pred_fallthru
          _
        %s162 = sand.u32 %s28, 1
        %s163 = scalar_lea.sflag [#allocation3], %s162
        %s164 = sand.u32 %s28, 1
        %s165 = smul.addr %s164, 128
        %s166 = scalar_lea.vmem [#allocation2], %s165
        %p167 = pneg %p41
        %p168 = pneg %p38
        %p169 = pneg %p62
        %p170 = pneg %p59
        %p171 = pneg %p83
        %p172 = pneg %p80
        %p173 = pneg %p104
        %p174 = pneg %p101
        %s175 = smul.u32 16, %s20
        %v176 = vld [vmem:[%s156] sm:$0xff]
        %v177 = vld [vmem:[%s156 + $0x8] sm:$0xff]
        %v178 = vld [vmem:[%s156 + $0x10] sm:$0xff]
        %v179 = vld [vmem:[%s156 + $0x18] sm:$0xff]
        %v180 = vld [vmem:[%s156 + $0x20] sm:$0xff]
        %v181 = vld [vmem:[%s156 + $0x28] sm:$0xff]
        %v182 = vld [vmem:[%s156 + $0x30] sm:$0xff]
        %v183 = vld [vmem:[%s156 + $0x38] sm:$0xff]
        %v184 = vld [vmem:[%s156 + $0x40] sm:$0xff]
        %v185 = vld [vmem:[%s156 + $0x48] sm:$0xff]
        %v186 = vld [vmem:[%s156 + $0x50] sm:$0xff]
        %v187 = vld [vmem:[%s156 + $0x58] sm:$0xff]
        %v188 = vld [vmem:[%s156 + $0x60] sm:$0xff]
        %v189 = vld [vmem:[%s156 + $0x68] sm:$0xff]
        %v190 = vld [vmem:[%s156 + $0x70] sm:$0xff]
        %v191 = vld [vmem:[%s156 + $0x78] sm:$0xff]
        %v192 = vmin.f32 %v176, %v180
        %v193 = vmin.f32 %v177, %v181
        %v194 = vmin.f32 %v178, %v182
        %v195 = vmin.f32 %v179, %v183
        %v196 = vmin.f32 %v192, %v184
        %v197 = vmin.f32 %v193, %v185
        %v198 = vmin.f32 %v194, %v186
        %v199 = vmin.f32 %v195, %v187
        %v200 = vmin.f32 %v196, %v188
        %v201 = vmin.f32 %v197, %v189
        %v202 = vmin.f32 %v198, %v190
        %v203 = vmin.f32 %v199, %v191
        %v204 = vmin.f32 %v200, %v201
        %v205 = vmin.f32 %v202, %v203
        %v206 = vmin.f32 %v204, %v205
        %v207 = vrot.slane %v206, 4
        %v208 = vmin.f32 %v206, %v207
        %v209 = vrot.slane %v208, 2
        %v210 = vmin.f32 %v208, %v209
        %v211 = vrot.slane %v210, 1
        %v212 = vmin.f32 %v210, %v211
        %v213 = vmax.f32 %v176, %v180
        %v214 = vmax.f32 %v177, %v181
        %v215 = vmax.f32 %v178, %v182
        %v216 = vmax.f32 %v179, %v183
        %v217 = vmax.f32 %v213, %v184
        %v218 = vmax.f32 %v214, %v185
        %v219 = vmax.f32 %v215, %v186
        %v220 = vmax.f32 %v216, %v187
        %v221 = vmax.f32 %v217, %v188
        %v222 = vmax.f32 %v218, %v189
        %v223 = vmax.f32 %v219, %v190
        %v224 = vmax.f32 %v220, %v191
        %v225 = vmax.f32 %v221, %v222
        %v226 = vmax.f32 %v223, %v224
        %v227 = vmax.f32 %v225, %v226
        %v228 = vrot.slane %v227, 4
        %v229 = vmax.f32 %v227, %v228
        %v230 = vrot.slane %v229, 2
        %v231 = vmax.f32 %v229, %v230
        %v232 = vrot.slane %v231, 1
        %v233 = vmax.f32 %v231, %v232
        %v234 = vadd.f32 %v176, %v177
        %v235 = vadd.f32 %v234, %v178
        %v236 = vadd.f32 %v235, %v179
        %v237 = vadd.f32 %v236, %v180
        %v238 = vadd.f32 %v237, %v181
        %v239 = vadd.f32 %v238, %v182
        %v240 = vadd.f32 %v239, %v183
        %v241 = vadd.f32 %v240, %v184
        %v242 = vadd.f32 %v241, %v185
        %v243 = vadd.f32 %v242, %v186
        %v244 = vadd.f32 %v243, %v187
        %v245 = vadd.f32 %v244, %v188
        %v246 = vadd.f32 %v245, %v189
        %v247 = vadd.f32 %v246, %v190
        %v248 = vadd.f32 %v247, %v191
        %v249 = vrot.slane %v248, 4
        %v250 = vadd.f32 %v248, %v249
        %v251 = vrot.slane %v250, 2
        %v252 = vadd.f32 %v250, %v251
        %v253 = vrot.slane %v252, 1
        %v254 = vadd.f32 %v252, %v253
        %p255 = scmp.eq.s32.totalorder %s20, 0
        // Predicated region
        $region29: #{tpu_custom_call.1} parent=23 // pred_check
          %p256 = pneg %p255
        $region30: #{tpu_custom_call.1} parent=23 // pred_check_branch
          %258 = sbr.rel (%p256) target = $region32
        $region31: #{tpu_custom_call.1} parent=23 // pred_region
          %259 = vst [vmem:[#allocation5] sm:$0x1] %v212
          %260 = vst [vmem:[#allocation6] sm:$0x1] %v233
          %261 = vst [vmem:[#allocation8] sm:$0x1] %v254
        $region32: #{tpu_custom_call.1} parent=23 // pred_fallthru
          _
        %p262 = scmp.gt.s32.totalorder %s20, 0
        // Predicated region
        $region33: #{tpu_custom_call.1} parent=23 // pred_check
          %p263 = pneg %p262
        $region34: #{tpu_custom_call.1} parent=23 // pred_check_branch
          %265 = sbr.rel (%p263) target = $region36
        $region35: #{tpu_custom_call.1} parent=23 // pred_region
          %v266 = vld [vmem:[#allocation5] sm:$0x1]
          %v267 = vmin.f32 %v266, %v212
          %268 = vst [vmem:[#allocation5] sm:$0x1] %v267
          %v269 = vld [vmem:[#allocation6] sm:$0x1]
          %v270 = vmax.f32 %v269, %v233
          %271 = vst [vmem:[#allocation6] sm:$0x1] %v270
          %v272 = vld [vmem:[#allocation8] sm:$0x1]
          %v273 = vadd.f32 %v272, %v254
          %274 = vst [vmem:[#allocation8] sm:$0x1] %v273
        $region36: #{tpu_custom_call.1} parent=23 // pred_fallthru
          _
        // Predicated region
        $region37: #{tpu_custom_call.1} parent=23 // pred_check
          %p275 = pneg %p59
        $region38: #{tpu_custom_call.1} parent=23 // pred_check_branch
          %277 = sbr.rel (%p275) target = $region40
        $region39: #{tpu_custom_call.1} parent=23 // pred_region
          %279 = vsyncadd [#allocation4], 0
          %s281 = sshll.u32 [#allocation5], 4
          %s282 = int_to_ptr.vmem [resolvable:$true] %s281
          %s283 = sshll.u32 %s1, 4
          %s284 = int_to_ptr.hbm [resolvable:$true] %s283
          %286 = dma.vmem_to_hbm [thread:$0]  %s282, 16, %s284, [#allocation4]
        $region40: #{tpu_custom_call.1} parent=23 // pred_fallthru
          _
        // Predicated region
        $region41: #{tpu_custom_call.1} parent=23 // pred_check
          %p287 = pneg %p80
        $region42: #{tpu_custom_call.1} parent=23 // pred_check_branch
          %289 = sbr.rel (%p287) target = $region44
        $region43: #{tpu_custom_call.1} parent=23 // pred_region
          %291 = vsyncadd [#allocation7], 0
          %s293 = sshll.u32 [#allocation6], 4
          %s294 = int_to_ptr.vmem [resolvable:$true] %s293
          %s295 = sshll.u32 %s2, 4
          %s296 = int_to_ptr.hbm [resolvable:$true] %s295
          %298 = dma.vmem_to_hbm [thread:$0]  %s294, 16, %s296, [#allocation7]
        $region44: #{tpu_custom_call.1} parent=23 // pred_fallthru
          _
        // Predicated region
        $region45: #{tpu_custom_call.1} parent=23 // pred_check
          %p299 = pneg %p101
        $region46: #{tpu_custom_call.1} parent=23 // pred_check_branch
          %301 = sbr.rel (%p299) target = $region48
        $region47: #{tpu_custom_call.1} parent=23 // pred_region
          %303 = vsyncadd [#allocation7], 0
          %s305 = sshll.u32 [#allocation8], 4
          %s306 = int_to_ptr.vmem [resolvable:$true] %s305
          %s307 = sshll.u32 %s3, 4
          %s308 = int_to_ptr.hbm [resolvable:$true] %s307
          %310 = dma.vmem_to_hbm [thread:$0]  %s306, 16, %s308, [#allocation7]
        $region48: #{tpu_custom_call.1} parent=23 // pred_fallthru
          _
        // Predicated region
        $region49: #{tpu_custom_call.1} parent=23 // pred_check
          %p311 = pneg %p59
        $region50: #{tpu_custom_call.1} parent=23 // pred_check_branch
          %313 = sbr.rel (%p311) target = $region52
        $region51: #{tpu_custom_call.1} parent=23 // pred_region
          %315 = dma.done [#allocation4], 16
        $region52: #{tpu_custom_call.1} parent=23 // pred_fallthru
          _
        // Predicated region
        $region53: #{tpu_custom_call.1} parent=23 // pred_check
          %p316 = pneg %p80
        $region54: #{tpu_custom_call.1} parent=23 // pred_check_branch
          %318 = sbr.rel (%p316) target = $region56
        $region55: #{tpu_custom_call.1} parent=23 // pred_region
          %320 = dma.done [#allocation7], 16
        $region56: #{tpu_custom_call.1} parent=23 // pred_fallthru
          _
        // Predicated region
        $region57: #{tpu_custom_call.1} parent=23 // pred_check
          %p321 = pneg %p101
        $region58: #{tpu_custom_call.1} parent=23 // pred_check_branch
          %323 = sbr.rel (%p321) target = $region60
        $region59: #{tpu_custom_call.1} parent=23 // pred_region
          %325 = dma.done [#allocation7], 16
        $region60: #{tpu_custom_call.1} parent=23 // pred_fallthru
          _
      $region24: #{tpu_custom_call.1} parent=5 // pred_fallthru
        _
      %p326 = scmp.le.s32.totalorder 2, %s15
      // Predicated region
      $region61: #{tpu_custom_call.1} parent=5 // pred_check
        %p327 = pneg %p326
      $region62: #{tpu_custom_call.1} parent=5 // pred_check_branch
        %329 = sbr.rel (%p327) target = $region64
      $region63: #{tpu_custom_call.1} parent=5 // pred_region
        %s330 = ssub.s32 %s15, 2
      $region64: #{tpu_custom_call.1} parent=5 // pred_fallthru
        _
    $region6: #{tpu_custom_call.1} parent=1 // loop_footer
      %s19 = sadd.s32 1, %s15
    $region7: #{tpu_custom_call.1} parent=1 // loop_footer_branch
      %14 = sbr.rel target = $region3
    $region8: #{tpu_custom_call.1} parent=1 // loop_exit
      _
    %331 = vsyncpa [#allocation3], 1
    %s332 = scalar_lea.sflag [#allocation3], 1
    %333 = vsyncpa %s332, 1
    %334 = vsyncpa [#allocation4], 1
    %s335 = scalar_lea.sflag [#allocation4], 1
    %336 = vsyncpa %s335, 1
    %337 = vsyncpa [#allocation7], 1

</llo_original>
